<compile_context>
chip_gen: v7x
topology: tpu7x:2x2x1
jax: 0.10.0
libtpu: 0.0.40
codegen_flags: <defaults>
</compile_context>

<pallas_src>
import functools

import jax
import jax.numpy as jnp
from jax.experimental import pallas as pl
from jax.experimental.pallas import tpu as pltpu


_SMALL_INPUT_BYTES = 1 << 20           # below this, jnp.max is already at HBM roofline
_VMEM_LIMIT_BYTES = 32 * 1024 * 1024   # explicit scoped-VMEM budget (safe on v5e/v6e/v7x)
_TARGET_BLOCK_BYTES = 8 * 1024 * 1024  # ~8 MiB input blocks: per-step overhead -> few %
_MAX_CHUNK = 8192                      # lanes per spatial chunk (multiple of 128)
_FULL_WIDTH_ROW_BYTES = 64 * 1024      # per-row bytes small enough -> single spatial block


def _neutral_value(dtype):
    dtype = jnp.dtype(dtype)
    if jnp.issubdtype(dtype, jnp.floating):
        return float("-inf")
    return int(jnp.iinfo(dtype).min)


def _min_row_tile(itemsize):
    # Sub-32-bit dtypes pack along sublanes: (8,128) f32, (16,128) bf16, (32,128) int8.
    return max(8, 32 // int(itemsize))


def _choose_tiles(n_rows, n_cols, itemsize):
    """Pick (row_tile, chunk) obeying the (8,128) rule and the VMEM budget."""
    min_rows = _min_row_tile(itemsize)

    if n_cols * itemsize <= _FULL_WIDTH_ROW_BYTES:
        # Common MAC case: whole spatial extent in one lane-dense block.
        chunk = n_cols
    else:
        chunk = _MAX_CHUNK
        # Prefer a chunk that divides n_cols exactly (no tail masking at all),
        # as long as it stays within 2x of _MAX_CHUNK.
        if n_cols % 128 == 0:
            units = n_cols // 128
            for d in range(_MAX_CHUNK // 128, _MAX_CHUNK // 256, -1):
                if units % d == 0:
                    chunk = d * 128
                    break

    rows_for_target = max(_TARGET_BLOCK_BYTES // max(chunk * itemsize, 1), min_rows)
    row_tile = min(int(rows_for_target), n_rows)
    if row_tile >= n_rows:
        row_tile = n_rows                                   # full dim is always legal
    else:
        row_tile = max((row_tile // min_rows) * min_rows, min_rows)
    return int(row_tile), int(chunk)


def _full_width_kernel(x_ref, o_ref):
    # One DMA'd block per grid step, one cross-lane (XLU) reduce; no scratch,
    # no reduction grid axis, no masking.
    o_ref[...] = jnp.max(x_ref[...], axis=-1, keepdims=True).astype(o_ref.dtype)


def _make_chunked_kernel(total_cols, chunk_cols, neutral):
    assert chunk_cols % 128 == 0
    groups = chunk_cols // 128
    needs_mask = (total_cols % chunk_cols) != 0

    def kernel(x_ref, o_ref, acc_ref):
        c = pl.program_id(1)
        last = pl.num_programs(1) - 1

        @pl.when(c == 0)
        def _init():
            acc_ref[...] = jnp.full(acc_ref.shape, neutral, acc_ref.dtype)

        def fold(mask_tail):
            # Fold the chunk's 128-lane groups into a (row_tile, 128) accumulator:
            # VPU-only hot loop, much less accumulator VMEM traffic than a
            # full-chunk accumulator, and a 128-lane finalize reduce.
            acc = acc_ref[...]
            for g in range(groups):
                xg = x_ref[:, g * 128:(g + 1) * 128]
                if mask_tail:
                    base = c * chunk_cols + g * 128
                    lane = jax.lax.broadcasted_iota(jnp.int32, xg.shape, 1)
                    xg = jnp.where(lane < (total_cols - base), xg,
                                   jnp.asarray(neutral, dtype=xg.dtype))
                acc = jnp.maximum(acc, xg)
            acc_ref[...] = acc

        if needs_mask:
            # Keep the iota/compare/select off the steady-state path: only the
            # last spatial chunk can be ragged.
            @pl.when(c != last)
            def _fold_fast():
                fold(False)

            @pl.when(c == last)
            def _fold_masked():
                fold(True)
        else:
            fold(False)

        @pl.when(c == last)
        def _finalize():
            o_ref[...] = jnp.max(acc_ref[...], axis=-1,
                                 keepdims=True).astype(o_ref.dtype)

    return kernel


@functools.partial(jax.jit, static_argnames=("force_pallas",))
def mac(x, *, force_pallas=False):
    """MAC pooling. x: (B, C, H, W) -> (B, C, 1, 1)."""
    B, C, H, W = x.shape
    itemsize = jnp.dtype(x.dtype).itemsize

    if not force_pallas and x.size * itemsize < _SMALL_INPUT_BYTES:
        # Kernel launch + pipeline prologue dwarfs the data for tiny inputs.
        return jnp.max(x, axis=(2, 3), keepdims=True)

    n_rows = B * C
    n_cols = H * W
    x2d = x.reshape(n_rows, n_cols)

    row_tile, chunk = _choose_tiles(n_rows, n_cols, itemsize)
    row_grid = pl.cdiv(n_rows, row_tile)

    if chunk == n_cols:
        # Full-width spatial block: rows-only grid.
        out = pl.pallas_call(
            _full_width_kernel,
            out_shape=jax.ShapeDtypeStruct((n_rows, 1), x.dtype),
            grid=(row_grid,),
            in_specs=[pl.BlockSpec((row_tile, n_cols), lambda r: (r, 0))],
            out_specs=pl.BlockSpec((row_tile, 1), lambda r: (r, 0)),
            compiler_params=pltpu.CompilerParams(
                dimension_semantics=("parallel",),
                vmem_limit_bytes=_VMEM_LIMIT_BYTES),
        )(x2d)
    else:
        # Chunked spatial reduction with a 128-lane accumulator.
        neutral = _neutral_value(x.dtype)
        grid = (row_grid, pl.cdiv(n_cols, chunk))
        out = pl.pallas_call(
            _make_chunked_kernel(n_cols, chunk, neutral),
            out_shape=jax.ShapeDtypeStruct((n_rows, 1), x.dtype),
            grid=grid,
            in_specs=[pl.BlockSpec((row_tile, chunk), lambda r, c: (r, c))],
            out_specs=pl.BlockSpec((row_tile, 1), lambda r, c: (r, 0)),
            scratch_shapes=[pltpu.VMEM((row_tile, 128), x.dtype)],
            compiler_params=pltpu.CompilerParams(
                dimension_semantics=("parallel", "arbitrary"),
                vmem_limit_bytes=_VMEM_LIMIT_BYTES),
        )(x2d)

    return out.reshape(B, C, 1, 1)


if __name__ == "__main__":
    key = jax.random.PRNGKey(0)
    k1, k2, k3, k4 = jax.random.split(key, 4)

    # 1) Primary (small) test, matching the module's typical toy shape.
    #    Exercises the full-width fast path.
    B, C, H, W = 2, 4, 16, 16
    x = jax.random.normal(k1, (B, C, H, W), dtype=jnp.float32)
    y = mac(x, force_pallas=True)
    jax.block_until_ready(y)
    y_ref = jnp.max(x, axis=(2, 3), keepdims=True)
    assert y.shape == (B, C, 1, 1), y.shape
    assert jnp.allclose(y, y_ref), "mismatch vs reference (full-width f32)"

    # 2) bf16 full-width path (dtype-aware tiling, exact max selection).
    xb = jax.random.normal(k2, (B, C, H, W), dtype=jnp.bfloat16)
    yb = mac(xb, force_pallas=True)
    jax.block_until_ready(yb)
    yb_ref = jnp.max(xb, axis=(2, 3), keepdims=True)
    assert jnp.allclose(yb, yb_ref), "mismatch vs reference (full-width bf16)"

    # 3) Chunked path with ragged tail: 130*130 = 16900 > 16384 f32 lanes,
    #    16900 % 8192 != 0 -> last-chunk masking branch is exercised.
    B2, C2, H2, W2 = 2, 2, 130, 130
    x2 = jax.random.normal(k3, (B2, C2, H2, W2), dtype=jnp.float32)
    y2 = mac(x2, force_pallas=True)
    jax.block_until_ready(y2)
    y2_ref = jnp.max(x2, axis=(2, 3), keepdims=True)
    assert y2.shape == (B2, C2, 1, 1), y2.shape
    assert jnp.allclose(y2, y2_ref), "mismatch vs reference (chunked + mask)"

    # 4) Chunked path where a divisor chunk is found (no masking at all):
    #    144*128 = 18432 lanes -> chunk = 6144 divides exactly.
    B3, C3, H3, W3 = 2, 2, 144, 128
    x3 = jax.random.normal(k4, (B3, C3, H3, W3), dtype=jnp.float32)
    y3 = mac(x3, force_pallas=True)
    jax.block_until_ready(y3)
    y3_ref = jnp.max(x3, axis=(2, 3), keepdims=True)
    assert y3.shape == (B3, C3, 1, 1), y3.shape
    assert jnp.allclose(y3, y3_ref), "mismatch vs reference (chunked, exact chunks)"

    print("KERNEL_OK")
</pallas_src>

<mosaic_0001>
module attributes {stable_mosaic.version = 11 : i64} {
  func.func @_full_width_kernel(%arg0: i32, %arg1: memref<8x256xf32, #tpu.memory_space<vmem>>, %arg2: memref<8x1xf32, #tpu.memory_space<vmem>>) attributes {dimension_semantics = [#tpu.dimension_semantics<parallel>], iteration_bounds = array<i64: 1>, scalar_prefetch = 0 : i64, scratch_operands = 0 : i64, tpu.core_type = #tpu.core_type<tc>, window_params = [{transform_indices = @transform_0, window_bounds = array<i64: 8, 256>}, {transform_indices = @transform_1, window_bounds = array<i64: 8, 1>}]} {
    %c0 = arith.constant 0 : index
    %c0_0 = arith.constant 0 : index
    %0 = vector.load %arg1[%c0, %c0_0] : memref<8x256xf32, #tpu.memory_space<vmem>>, vector<8x256xf32>
    %cst = arith.constant dense<0xFF800000> : vector<8xf32>
    %1 = vector.multi_reduction <maximumf>, %0, %cst [1] : vector<8x256xf32> to vector<8xf32>
    %2 = vector.shape_cast %1 : vector<8xf32> to vector<8x1xf32>
    %c0_1 = arith.constant 0 : index
    %c0_2 = arith.constant 0 : index
    %3 = vector.load %arg2[%c0_1, %c0_2] : memref<8x1xf32, #tpu.memory_space<vmem>>, vector<8x1xf32>
    tpu.vector_store %arg2[%c0_1, %c0_2], %2 {strides = array<i32>} : memref<8x1xf32, #tpu.memory_space<vmem>>, vector<8x1xf32>,
    return
  }
  func.func @transform_0(%arg0: i32) -> (i32, i32) {
    %c0_i32 = arith.constant 0 : i32
    %c0_i32_0 = arith.constant 0 : i32
    return %arg0, %c0_i32 : i32, i32
  }
  func.func @transform_1(%arg0: i32) -> (i32, i32) {
    %c0_i32 = arith.constant 0 : i32
    %c0_i32_0 = arith.constant 0 : i32
    return %arg0, %c0_i32 : i32, i32
  }
}

</mosaic_0001>

<llo_original>
// kernel: mac.1
$region0: #{mac.1}
  #allocation0 [shape = 'u32[]', space=smem, size = 0x4, offset = 0x4, fixed_abs, tag = 'smem constant byte address 0x4 - core index']
  #allocation1 [shape = 'u32[144,128]{1,0:T(1,128)}', space=vmem, size = 0x12000, scoped, tag = 'internal scratch']
  %s0 = inlined_call_operand.vmem [shape: f32[8,256], index: 0, kind: input, shape index: {}]
  %s1 = inlined_call_operand.vmem [shape: f32[8,1], index: 1, kind: output, shape index: {}]
  %s2 = sld [smem:[#allocation0]]
  $region14: #{mac.1} parent=0
    _
  %s4 = ssub.s32 1, %s2
  %s5 = scalar_select 0, %s4, %s2
  // Predicated region
  $region2: #{mac.1} parent=0 // pred_check
    _
  $region3: #{mac.1} parent=0 // pred_check_branch
    %7 = sbr.rel (0) target = $region5
  $region4: #{mac.1} parent=0 // pred_region
    _
  $region5: #{mac.1} parent=0 // pred_fallthru
    _
  %v8 = vld [vmem:[%s0] sm:$0xff]
  %v9 = vld [vmem:[%s0 + $0x8] sm:$0xff]
  %v10 = vmax.f32 %v8, %v9
  %11 = vmax.xlane.f32.xlu0 %v10
  %v12 = vpop.xlane.xlu0 %11
  %vm13 = vcmask 7168
  %14 = vst.msk [vmem:[%s1] sm:$0xff] %vm13, %v12
  // Predicated region
  $region6: #{mac.1} parent=0 // pred_check
    _
  $region7: #{mac.1} parent=0 // pred_check_branch
    %16 = sbr.rel (0) target = $region9
  $region8: #{mac.1} parent=0 // pred_region
    _
  $region9: #{mac.1} parent=0 // pred_fallthru
    _
  // Predicated region
  $region10: #{mac.1} parent=0 // pred_check
    _
  $region11: #{mac.1} parent=0 // pred_check_branch
    %18 = sbr.rel (0) target = $region13
  $region12: #{mac.1} parent=0 // pred_region
    _
  $region13: #{mac.1} parent=0 // pred_fallthru
    _

</llo_original>
